<compile_context>
chip_gen: v7x
topology: tpu7x:2x2x1
jax: 0.10.0
libtpu: 0.0.40
codegen_flags: <defaults>
</compile_context>

<pallas_src>
import functools
import math

import jax
import jax.numpy as jnp
from jax.experimental import pallas as pl
from jax.experimental.pallas import tpu as pltpu


def _round_up(x, m):
    return ((x + m - 1) // m) * m


def _transe_kernel(norm, h_ref, r_ref, t_ref, o_ref):
    """One grid step: score TB triples.

    h_ref, r_ref, t_ref : (TB, D) f32 gathered embedding rows.
    o_ref               : (TB, 1) f32 scores ||h + r - t||_norm.
    """
    d = h_ref[...] + r_ref[...] - t_ref[...]          # (TB, D) on the VPU

    if norm == 2:
        mag = d * d
    elif norm == 1:
        mag = jnp.abs(d)
    elif float(norm).is_integer():
        # small integer p: repeated VPU multiplies instead of EUP pow
        a = jnp.abs(d)
        mag = a
        for _ in range(int(norm) - 1):
            mag = mag * a
    else:  # truly fractional p >= 1 (p=0 / p=inf rejected in __init__)
        mag = jnp.abs(d) ** float(norm)

    # Lane reduction on the MXU with a non-transposed (D, 1) RHS:
    # (TB, D) @ (D, 1) -> (TB, 1), matching the (TB, 1) output block.
    ones = jnp.ones((mag.shape[-1], 1), jnp.float32)
    s = jnp.dot(mag, ones,
                preferred_element_type=jnp.float32,
                precision=jax.lax.Precision.HIGHEST)  # (TB, 1)

    # Guard against tiny negative sums from the multi-pass MXU accumulation
    # when h + r == t.
    if norm == 2:
        s = jnp.sqrt(jnp.maximum(s, 0.0))
    elif norm != 1:
        s = jnp.maximum(s, 0.0) ** (1.0 / float(norm))

    o_ref[...] = s


@functools.partial(jax.jit, static_argnames=("norm", "tb_request"))
def _transe_scores(ent_emb, rel_emb, h_idx, r_idx, t_idx, norm, tb_request):
    """Scores for N stacked triples; returns (N,) f32."""
    N = h_idx.shape[0]
    D = ent_emb.shape[1]

    # Row-tile selection (all static, trace-time Python):
    #  * keep 3 inputs x 2 pipeline buffers x TB x D x 4 B under ~16 MiB so the
    #    explicit 32 MiB scoped-VMEM limit below is safe on v5e/v6e/v7x,
    #  * never tile past round_up(N, 128),
    #  * when N > 128, keep >= 2 grid steps so the "parallel" batch axis can be
    #    sharded across v7x's two TensorCores.
    vmem_input_budget = 16 * 1024 * 1024
    tb_cap = max(128, (vmem_input_budget // (3 * 2 * D * 4)) // 128 * 128)
    tb = max(128, (min(tb_request, tb_cap) // 128) * 128)
    tb = min(tb, _round_up(N, 128))
    if N > 128:
        tb = min(tb, _round_up(pl.cdiv(N, 2), 128))

    n_tiles = pl.cdiv(N, tb)
    n_pad = n_tiles * tb
    pad = n_pad - N

    # Pad index vectors (index 0 is always valid) so blocks tile evenly.
    h_idx = jnp.pad(h_idx, (0, pad))
    r_idx = jnp.pad(r_idx, (0, pad))
    t_idx = jnp.pad(t_idx, (0, pad))

    # Dense gather in XLA: three contiguous (n_pad, D) operands for the kernel.
    # TODO(synk): the gathered h/r/t make one HBM round-trip (XLA writes them,
    # the kernel re-reads them). Fusing the gather into the pallas input DMA
    # (allow_input_fusion) or an in-kernel scalar-prefetch row gather
    # (worthwhile once D >= 512) would roughly halve HBM traffic.
    h = jnp.take(ent_emb, h_idx, axis=0)
    r = jnp.take(rel_emb, r_idx, axis=0)
    t = jnp.take(ent_emb, t_idx, axis=0)

    kernel = functools.partial(_transe_kernel, norm)
    row_spec = pl.BlockSpec((tb, D), lambda i: (i, 0))

    out = pl.pallas_call(
        kernel,
        out_shape=jax.ShapeDtypeStruct((n_pad, 1), jnp.float32),
        grid_spec=pltpu.PrefetchScalarGridSpec(
            num_scalar_prefetch=0,
            grid=(n_tiles,),
            in_specs=[row_spec, row_spec, row_spec],
            out_specs=pl.BlockSpec((tb, 1), lambda i: (i, 0)),
        ),
        compiler_params=pltpu.CompilerParams(
            dimension_semantics=("parallel",),
            vmem_limit_bytes=32 * 1024 * 1024,
        ),
    )(h, r, t)

    return out[:N, 0]


class TransEModelPallas:
    """JAX/Pallas port of the PyTorch TransEModel forward pass."""

    def __init__(self, ent_total, rel_total, dim, margin=1.0, norm=2,
                 seed=0, tile_rows=1024):
        if not (isinstance(norm, (int, float)) and math.isfinite(norm)
                and norm >= 1):
            # torch.norm with p=0 / p=inf has different semantics; not supported.
            raise ValueError(f"norm must be a finite number >= 1, got {norm}")
        self.ent_total = ent_total
        self.rel_total = rel_total
        self.dim = dim
        self.margin = margin
        self.norm = norm
        self.tile_rows = tile_rows

        key = jax.random.PRNGKey(seed)
        k_ent, k_rel = jax.random.split(key)
        # xavier_uniform_ on a (rows, cols) 2-D tensor:
        #   bound = sqrt(6 / (fan_in + fan_out)) with fan_in=dim, fan_out=rows
        ent_bound = math.sqrt(6.0 / (dim + ent_total))
        rel_bound = math.sqrt(6.0 / (dim + rel_total))
        self.ent_embeddings = jax.random.uniform(
            k_ent, (ent_total, dim), jnp.float32, -ent_bound, ent_bound)
        self.rel_embeddings = jax.random.uniform(
            k_rel, (rel_total, dim), jnp.float32, -rel_bound, rel_bound)

    def forward(self, pos_triple, neg_triple):
        pos_h, pos_r, pos_t = (jnp.asarray(x, jnp.int32) for x in pos_triple)
        neg_h, neg_r, neg_t = (jnp.asarray(x, jnp.int32) for x in neg_triple)
        B = pos_h.shape[0]

        # Stack pos and neg triples along the batch axis -> one kernel launch,
        # one gather per table role, single output slab.
        h_idx = jnp.concatenate([pos_h, neg_h])
        r_idx = jnp.concatenate([pos_r, neg_r])
        t_idx = jnp.concatenate([pos_t, neg_t])

        scores = _transe_scores(self.ent_embeddings, self.rel_embeddings,
                                h_idx, r_idx, t_idx,
                                self.norm, self.tile_rows)
        return scores[:B], scores[B:]

    def predict(self, triple):
        h, r, t = (jnp.asarray(x, jnp.int32) for x in triple)
        return jax.device_get(
            _transe_scores(self.ent_embeddings, self.rel_embeddings,
                           h, r, t, self.norm, self.tile_rows))

    # pure-JAX reference (for verification only)
    def _forward_ref(self, pos_triple, neg_triple):
        def calc(h, r, t):
            d = (self.ent_embeddings[h] + self.rel_embeddings[r]
                 - self.ent_embeddings[t])
            return jnp.linalg.norm(d, ord=self.norm, axis=-1)
        ph, pr, pt = pos_triple
        nh, nr, nt = neg_triple
        return calc(ph, pr, pt), calc(nh, nr, nt)


if __name__ == "__main__":
    ENT_TOTAL, REL_TOTAL, DIM, BATCH = 32, 16, 128, 8

    model = TransEModelPallas(ENT_TOTAL, REL_TOTAL, DIM, margin=1.0, norm=2)

    def make_triples(key, batch):
        k1, k2, k3, k4, k5, k6 = jax.random.split(key, 6)
        pos = (jax.random.randint(k1, (batch,), 0, ENT_TOTAL, jnp.int32),
               jax.random.randint(k2, (batch,), 0, REL_TOTAL, jnp.int32),
               jax.random.randint(k3, (batch,), 0, ENT_TOTAL, jnp.int32))
        neg = (jax.random.randint(k4, (batch,), 0, ENT_TOTAL, jnp.int32),
               jax.random.randint(k5, (batch,), 0, REL_TOTAL, jnp.int32),
               jax.random.randint(k6, (batch,), 0, ENT_TOTAL, jnp.int32))
        return pos, neg

    pos_triple, neg_triple = make_triples(jax.random.PRNGKey(0), BATCH)

    # small-batch, single-tile path (L2 norm)
    p_score, n_score = model.forward(pos_triple, neg_triple)
    jax.block_until_ready((p_score, n_score))
    p_ref, n_ref = model._forward_ref(pos_triple, neg_triple)
    assert p_score.shape == (BATCH,) and n_score.shape == (BATCH,)
    assert jnp.allclose(p_score, p_ref, rtol=1e-5, atol=1e-4)
    assert jnp.allclose(n_score, n_ref, rtol=1e-5, atol=1e-4)

    # L1-norm path
    model_l1 = TransEModelPallas(ENT_TOTAL, REL_TOTAL, DIM, margin=1.0, norm=1)
    p1, n1 = model_l1.forward(pos_triple, neg_triple)
    jax.block_until_ready((p1, n1))
    p1r, n1r = model_l1._forward_ref(pos_triple, neg_triple)
    assert jnp.allclose(p1, p1r, rtol=1e-5, atol=1e-4)
    assert jnp.allclose(n1, n1r, rtol=1e-5, atol=1e-4)

    # multi-tile path (N > 128 -> 2 grid steps, exercises padding + megacore split)
    BATCH2 = 192
    pos2, neg2 = make_triples(jax.random.PRNGKey(1), BATCH2)
    p2, n2 = model.forward(pos2, neg2)
    jax.block_until_ready((p2, n2))
    p2r, n2r = model._forward_ref(pos2, neg2)
    assert p2.shape == (BATCH2,) and n2.shape == (BATCH2,)
    assert jnp.allclose(p2, p2r, rtol=1e-5, atol=1e-4)
    assert jnp.allclose(n2, n2r, rtol=1e-5, atol=1e-4)

    print("KERNEL_OK")
</pallas_src>

<mosaic_0001>
module attributes {stable_mosaic.version = 11 : i64} {
  func.func @_transe_kernel(%arg0: i32, %arg1: memref<128x128xf32, #tpu.memory_space<vmem>>, %arg2: memref<128x128xf32, #tpu.memory_space<vmem>>, %arg3: memref<128x128xf32, #tpu.memory_space<vmem>>, %arg4: memref<128x1xf32, #tpu.memory_space<vmem>>) attributes {dimension_semantics = [#tpu.dimension_semantics<parallel>], iteration_bounds = array<i64: 1>, scalar_prefetch = 0 : i64, scratch_operands = 0 : i64, tpu.core_type = #tpu.core_type<tc>, window_params = [{transform_indices = @transform_0, window_bounds = array<i64: 128, 128>}, {transform_indices = @transform_1, window_bounds = array<i64: 128, 128>}, {transform_indices = @transform_2, window_bounds = array<i64: 128, 128>}, {transform_indices = @transform_3, window_bounds = array<i64: 128, 1>}]} {
    %c0 = arith.constant 0 : index
    %c0_0 = arith.constant 0 : index
    %0 = vector.load %arg1[%c0, %c0_0] : memref<128x128xf32, #tpu.memory_space<vmem>>, vector<128x128xf32>
    %c0_1 = arith.constant 0 : index
    %c0_2 = arith.constant 0 : index
    %1 = vector.load %arg2[%c0_1, %c0_2] : memref<128x128xf32, #tpu.memory_space<vmem>>, vector<128x128xf32>
    %2 = arith.addf %0, %1 : vector<128x128xf32>
    %c0_3 = arith.constant 0 : index
    %c0_4 = arith.constant 0 : index
    %3 = vector.load %arg3[%c0_3, %c0_4] : memref<128x128xf32, #tpu.memory_space<vmem>>, vector<128x128xf32>
    %4 = arith.subf %2, %3 : vector<128x128xf32>
    %5 = arith.mulf %4, %4 : vector<128x128xf32>
    %cst = arith.constant 1.000000e+00 : f32
    %6 = vector.broadcast %cst : f32 to vector<128x1xf32>
    %cst_5 = arith.constant dense<0.000000e+00> : vector<128x1xf32>
    %7 = tpu.matmul %5, %6, %cst_5 {dimension_numbers = #tpu.dot_dimension_numbers<[1], [0], [0], [1], [0, 0, 1, 1], [], []>, precision = #tpu.contract_precision<fp32>} : vector<128x128xf32>, vector<128x1xf32>, vector<128x1xf32> -> vector<128x1xf32>
    %cst_6 = arith.constant 0.000000e+00 : f32
    %8 = vector.broadcast %cst_6 : f32 to vector<128x1xf32>
    %9 = arith.maximumf %7, %8 : vector<128x1xf32>
    %10 = math.sqrt %9 : vector<128x1xf32>
    %c0_7 = arith.constant 0 : index
    %c0_8 = arith.constant 0 : index
    %11 = vector.load %arg4[%c0_7, %c0_8] : memref<128x1xf32, #tpu.memory_space<vmem>>, vector<128x1xf32>
    tpu.vector_store %arg4[%c0_7, %c0_8], %10 {strides = array<i32>} : memref<128x1xf32, #tpu.memory_space<vmem>>, vector<128x1xf32>,
    return
  }
  func.func @transform_0(%arg0: i32) -> (i32, i32) {
    %c0_i32 = arith.constant 0 : i32
    %c0_i32_0 = arith.constant 0 : i32
    return %arg0, %c0_i32 : i32, i32
  }
  func.func @transform_1(%arg0: i32) -> (i32, i32) {
    %c0_i32 = arith.constant 0 : i32
    %c0_i32_0 = arith.constant 0 : i32
    return %arg0, %c0_i32 : i32, i32
  }
  func.func @transform_2(%arg0: i32) -> (i32, i32) {
    %c0_i32 = arith.constant 0 : i32
    %c0_i32_0 = arith.constant 0 : i32
    return %arg0, %c0_i32 : i32, i32
  }
  func.func @transform_3(%arg0: i32) -> (i32, i32) {
    %c0_i32 = arith.constant 0 : i32
    %c0_i32_0 = arith.constant 0 : i32
    return %arg0, %c0_i32 : i32, i32
  }
}

</mosaic_0001>

<llo_original>
// kernel: _transe_scores.1
$region0: #{_transe_scores.1}
  #allocation0 [shape = 'u32[]', space=smem, size = 0x4, offset = 0x4, fixed_abs, tag = 'smem constant byte address 0x4 - core index']
  #allocation1 [shape = 'u32[144,128]{1,0:T(1,128)}', space=vmem, size = 0x12000, scoped, tag = 'internal scratch']
  %s0 = inlined_call_operand.vmem [shape: f32[128,128], index: 0, kind: input, shape index: {}]
  %s1 = inlined_call_operand.vmem [shape: f32[128,128], index: 1, kind: input, shape index: {}]
  %s2 = inlined_call_operand.vmem [shape: f32[128,128], index: 2, kind: input, shape index: {}]
  %s3 = inlined_call_operand.vmem [shape: f32[128,1], index: 3, kind: output, shape index: {}]
  %s4 = sld [smem:[#allocation0]]
  $region22: #{_transe_scores.1} parent=0
    _
  %s6 = ssub.s32 1, %s4
  %s7 = scalar_select 0, %s6, %s4
  // Predicated region
  $region2: #{_transe_scores.1} parent=0 // pred_check
    _
  $region3: #{_transe_scores.1} parent=0 // pred_check_branch
    %9 = sbr.rel (0) target = $region5
  $region4: #{_transe_scores.1} parent=0 // pred_region
    _
  $region5: #{_transe_scores.1} parent=0 // pred_fallthru
    _
  // Predicated region
  $region6: #{_transe_scores.1} parent=0 // pred_check
    _
  $region7: #{_transe_scores.1} parent=0 // pred_check_branch
    %11 = sbr.rel (0) target = $region9
  $region8: #{_transe_scores.1} parent=0 // pred_region
    _
  $region9: #{_transe_scores.1} parent=0 // pred_fallthru
    _
  // Predicated region
  $region10: #{_transe_scores.1} parent=0 // pred_check
    _
  $region11: #{_transe_scores.1} parent=0 // pred_check_branch
    %13 = sbr.rel (0) target = $region13
  $region12: #{_transe_scores.1} parent=0 // pred_region
    _
  $region13: #{_transe_scores.1} parent=0 // pred_fallthru
    _
  %v14 = vld [vmem:[%s0] sm:$0xff]
  %v15 = vld [vmem:[%s0 + $0x8] sm:$0xff]
  %v16 = vld [vmem:[%s0 + $0x10] sm:$0xff]
  %v17 = vld [vmem:[%s0 + $0x18] sm:$0xff]
  %v18 = vld [vmem:[%s0 + $0x20] sm:$0xff]
  %v19 = vld [vmem:[%s0 + $0x28] sm:$0xff]
  %v20 = vld [vmem:[%s0 + $0x30] sm:$0xff]
  %v21 = vld [vmem:[%s0 + $0x38] sm:$0xff]
  %v22 = vld [vmem:[%s0 + $0x40] sm:$0xff]
  %v23 = vld [vmem:[%s0 + $0x48] sm:$0xff]
  %v24 = vld [vmem:[%s0 + $0x50] sm:$0xff]
  %v25 = vld [vmem:[%s0 + $0x58] sm:$0xff]
  %v26 = vld [vmem:[%s0 + $0x60] sm:$0xff]
  %v27 = vld [vmem:[%s0 + $0x68] sm:$0xff]
  %v28 = vld [vmem:[%s0 + $0x70] sm:$0xff]
  %v29 = vld [vmem:[%s0 + $0x78] sm:$0xff]
  %v30 = vld [vmem:[%s1] sm:$0xff]
  %v31 = vld [vmem:[%s1 + $0x8] sm:$0xff]
  %v32 = vld [vmem:[%s1 + $0x10] sm:$0xff]
  %v33 = vld [vmem:[%s1 + $0x18] sm:$0xff]
  %v34 = vld [vmem:[%s1 + $0x20] sm:$0xff]
  %v35 = vld [vmem:[%s1 + $0x28] sm:$0xff]
  %v36 = vld [vmem:[%s1 + $0x30] sm:$0xff]
  %v37 = vld [vmem:[%s1 + $0x38] sm:$0xff]
  %v38 = vld [vmem:[%s1 + $0x40] sm:$0xff]
  %v39 = vld [vmem:[%s1 + $0x48] sm:$0xff]
  %v40 = vld [vmem:[%s1 + $0x50] sm:$0xff]
  %v41 = vld [vmem:[%s1 + $0x58] sm:$0xff]
  %v42 = vld [vmem:[%s1 + $0x60] sm:$0xff]
  %v43 = vld [vmem:[%s1 + $0x68] sm:$0xff]
  %v44 = vld [vmem:[%s1 + $0x70] sm:$0xff]
  %v45 = vld [vmem:[%s1 + $0x78] sm:$0xff]
  %v46 = vadd.f32 %v14, %v30
  %v47 = vadd.f32 %v15, %v31
  %v48 = vadd.f32 %v16, %v32
  %v49 = vadd.f32 %v17, %v33
  %v50 = vadd.f32 %v18, %v34
  %v51 = vadd.f32 %v19, %v35
  %v52 = vadd.f32 %v20, %v36
  %v53 = vadd.f32 %v21, %v37
  %v54 = vadd.f32 %v22, %v38
  %v55 = vadd.f32 %v23, %v39
  %v56 = vadd.f32 %v24, %v40
  %v57 = vadd.f32 %v25, %v41
  %v58 = vadd.f32 %v26, %v42
  %v59 = vadd.f32 %v27, %v43
  %v60 = vadd.f32 %v28, %v44
  %v61 = vadd.f32 %v29, %v45
  %v62 = vld [vmem:[%s2] sm:$0xff]
  %v63 = vld [vmem:[%s2 + $0x8] sm:$0xff]
  %v64 = vld [vmem:[%s2 + $0x10] sm:$0xff]
  %v65 = vld [vmem:[%s2 + $0x18] sm:$0xff]
  %v66 = vld [vmem:[%s2 + $0x20] sm:$0xff]
  %v67 = vld [vmem:[%s2 + $0x28] sm:$0xff]
  %v68 = vld [vmem:[%s2 + $0x30] sm:$0xff]
  %v69 = vld [vmem:[%s2 + $0x38] sm:$0xff]
  %v70 = vld [vmem:[%s2 + $0x40] sm:$0xff]
  %v71 = vld [vmem:[%s2 + $0x48] sm:$0xff]
  %v72 = vld [vmem:[%s2 + $0x50] sm:$0xff]
  %v73 = vld [vmem:[%s2 + $0x58] sm:$0xff]
  %v74 = vld [vmem:[%s2 + $0x60] sm:$0xff]
  %v75 = vld [vmem:[%s2 + $0x68] sm:$0xff]
  %v76 = vld [vmem:[%s2 + $0x70] sm:$0xff]
  %v77 = vld [vmem:[%s2 + $0x78] sm:$0xff]
  %v78 = vsub.f32 %v46, %v62
  %v79 = vsub.f32 %v47, %v63
  %v80 = vsub.f32 %v48, %v64
  %v81 = vsub.f32 %v49, %v65
  %v82 = vsub.f32 %v50, %v66
  %v83 = vsub.f32 %v51, %v67
  %v84 = vsub.f32 %v52, %v68
  %v85 = vsub.f32 %v53, %v69
  %v86 = vsub.f32 %v54, %v70
  %v87 = vsub.f32 %v55, %v71
  %v88 = vsub.f32 %v56, %v72
  %v89 = vsub.f32 %v57, %v73
  %v90 = vsub.f32 %v58, %v74
  %v91 = vsub.f32 %v59, %v75
  %v92 = vsub.f32 %v60, %v76
  %v93 = vsub.f32 %v61, %v77
  %v94 = vmul.f32 %v78, %v78
  %v95 = vmul.f32 %v79, %v79
  %v96 = vmul.f32 %v80, %v80
  %v97 = vmul.f32 %v81, %v81
  %v98 = vmul.f32 %v82, %v82
  %v99 = vmul.f32 %v83, %v83
  %v100 = vmul.f32 %v84, %v84
  %v101 = vmul.f32 %v85, %v85
  %v102 = vmul.f32 %v86, %v86
  %v103 = vmul.f32 %v87, %v87
  %v104 = vmul.f32 %v88, %v88
  %v105 = vmul.f32 %v89, %v89
  %v106 = vmul.f32 %v90, %v90
  %v107 = vmul.f32 %v91, %v91
  %v108 = vmul.f32 %v92, %v92
  %v109 = vmul.f32 %v93, %v93
  %110 = vmatprep.subr.mxu0 0.0
  %111 = vmatpush1.msra.mxu0 1.0
  %112 = vmatprep.subr.mxu0 0.0
  %113 = vmatpush1.msra.mxu0 1.0
  %114 = vmatprep.subr.mxu0 0.0
  %115 = vmatpush1.msra.mxu0 1.0
  %116 = vmatprep.subr.mxu0 0.0
  %117 = vmatpush1.msra.mxu0 1.0
  %118 = vmatprep.subr.mxu0 0.0
  %119 = vmatpush1.msra.mxu0 1.0
  %120 = vmatprep.subr.mxu0 0.0
  %121 = vmatpush1.msra.mxu0 1.0
  %122 = vmatprep.subr.mxu0 0.0
  %123 = vmatpush1.msra.mxu0 1.0
  %124 = vmatprep.subr.mxu0 0.0
  %125 = vmatpush1.msra.mxu0 1.0
  %126 = vmatprep.subr.mxu0 0.0
  %127 = vmatpush1.msra.mxu0 1.0
  %128 = vmatprep.subr.mxu0 0.0
  %129 = vmatpush1.msra.mxu0 1.0
  %130 = vmatprep.subr.mxu0 0.0
  %131 = vmatpush1.msra.mxu0 1.0
  %132 = vmatprep.subr.mxu0 0.0
  %133 = vmatpush1.msra.mxu0 1.0
  %134 = vmatprep.subr.mxu0 0.0
  %135 = vmatpush1.msra.mxu0 1.0
  %136 = vmatprep.subr.mxu0 0.0
  %137 = vmatpush1.msra.mxu0 1.0
  %138 = vmatprep.subr.mxu0 0.0
  %139 = vmatpush1.msra.mxu0 1.0
  %140 = vmatprep.subr.mxu0 0.0
  %141 = vmatpush1.msra.mxu0 1.0
  %142 = vmatprep.subr.mxu0 0.0
  %143 = vmatpush1.msra.mxu0 0.0
  %144 = vmatprep.subr.mxu0 0.0
  %145 = vmatpush1.msra.mxu0 0.0
  %146 = vmatprep.subr.mxu0 0.0
  %147 = vmatpush1.msra.mxu0 0.0
  %148 = vmatprep.subr.mxu0 0.0
  %149 = vmatpush1.msra.mxu0 0.0
  %150 = vmatprep.subr.mxu0 0.0
  %151 = vmatpush1.msra.mxu0 0.0
  %152 = vmatprep.subr.mxu0 0.0
  %153 = vmatpush1.msra.mxu0 0.0
  %154 = vmatprep.subr.mxu0 0.0
  %155 = vmatpush1.msra.mxu0 0.0
  %156 = vmatprep.subr.mxu0 0.0
  %157 = vmatpush1.msra.mxu0 0.0
  %158 = vmatprep.subr.mxu0 0.0
  %159 = vmatpush1.msra.mxu0 0.0
  %160 = vmatprep.subr.mxu0 0.0
  %161 = vmatpush1.msra.mxu0 0.0
  %162 = vmatprep.subr.mxu0 0.0
  %163 = vmatpush1.msra.mxu0 0.0
  %164 = vmatprep.subr.mxu0 0.0
  %165 = vmatpush1.msra.mxu0 0.0
  %166 = vmatprep.subr.mxu0 0.0
  %167 = vmatpush1.msra.mxu0 0.0
  %168 = vmatprep.subr.mxu0 0.0
  %169 = vmatpush1.msra.mxu0 0.0
  %170 = vmatprep.subr.mxu0 0.0
  %171 = vmatpush1.msra.mxu0 0.0
  %172 = vmatprep.subr.mxu0 0.0
  %173 = vmatpush1.msra.mxu0 0.0
  %174 = vmatprep.mubr.f32.mxu0 0.0
  %v175 = vand.u32 %v94, 4294901760
  %v176 = vsub.f32 %v94, %v175
  %v177 = vand.u32 %v176, 4294901760
  %v178 = vsub.f32 %v176, %v177
  %v179 = vand.u32 %v178, 4294901760
  %180 = vmatmul.mubr.f32.gmra.mrb[0].mxu0 %v179
  %v181 = vpop.f32.mrb[0].mxu0
  %v182 = vadd.f32 0.0, %v181
  %v183 = vpop.f32.mrb[0].mxu0
  %184 = vmatprep.mubr.f32.mxu0 0.0
  %v185 = vand.u32 %v95, 4294901760
  %v186 = vsub.f32 %v95, %v185
  %v187 = vand.u32 %v186, 4294901760
  %v188 = vsub.f32 %v186, %v187
  %v189 = vand.u32 %v188, 4294901760
  %190 = vmatmul.mubr.f32.gmra.mrb[0].mxu0 %v189
  %v191 = vpop.f32.mrb[0].mxu0
  %v192 = vadd.f32 0.0, %v191
  %v193 = vpop.f32.mrb[0].mxu0
  %194 = vmatprep.mubr.f32.mxu0 0.0
  %v195 = vand.u32 %v96, 4294901760
  %v196 = vsub.f32 %v96, %v195
  %v197 = vand.u32 %v196, 4294901760
  %v198 = vsub.f32 %v196, %v197
  %v199 = vand.u32 %v198, 4294901760
  %200 = vmatmul.mubr.f32.gmra.mrb[0].mxu0 %v199
  %v201 = vpop.f32.mrb[0].mxu0
  %v202 = vadd.f32 0.0, %v201
  %v203 = vpop.f32.mrb[0].mxu0
  %204 = vmatprep.mubr.f32.mxu0 0.0
  %v205 = vand.u32 %v97, 4294901760
  %v206 = vsub.f32 %v97, %v205
  %v207 = vand.u32 %v206, 4294901760
  %v208 = vsub.f32 %v206, %v207
  %v209 = vand.u32 %v208, 4294901760
  %210 = vmatmul.mubr.f32.gmra.mrb[0].mxu0 %v209
  %v211 = vpop.f32.mrb[0].mxu0
  %v212 = vadd.f32 0.0, %v211
  %v213 = vpop.f32.mrb[0].mxu0
  %214 = vmatprep.mubr.f32.mxu0 0.0
  %v215 = vand.u32 %v98, 4294901760
  %v216 = vsub.f32 %v98, %v215
  %v217 = vand.u32 %v216, 4294901760
  %v218 = vsub.f32 %v216, %v217
  %v219 = vand.u32 %v218, 4294901760
  %220 = vmatmul.mubr.f32.gmra.mrb[0].mxu0 %v219
  %v221 = vpop.f32.mrb[0].mxu0
  %v222 = vadd.f32 0.0, %v221
  %v223 = vpop.f32.mrb[0].mxu0
  %224 = vmatprep.mubr.f32.mxu0 0.0
  %v225 = vand.u32 %v99, 4294901760
  %v226 = vsub.f32 %v99, %v225
  %v227 = vand.u32 %v226, 4294901760
  %v228 = vsub.f32 %v226, %v227
  %v229 = vand.u32 %v228, 4294901760
  %230 = vmatmul.mubr.f32.gmra.mrb[0].mxu0 %v229
  %v231 = vpop.f32.mrb[0].mxu0
  %v232 = vadd.f32 0.0, %v231
  %v233 = vpop.f32.mrb[0].mxu0
  %234 = vmatprep.mubr.f32.mxu0 0.0
  %v235 = vand.u32 %v100, 4294901760
  %v236 = vsub.f32 %v100, %v235
  %v237 = vand.u32 %v236, 4294901760
  %v238 = vsub.f32 %v236, %v237
  %v239 = vand.u32 %v238, 4294901760
  %240 = vmatmul.mubr.f32.gmra.mrb[0].mxu0 %v239
  %v241 = vpop.f32.mrb[0].mxu0
  %v242 = vadd.f32 0.0, %v241
  %v243 = vpop.f32.mrb[0].mxu0
  %244 = vmatprep.mubr.f32.mxu0 0.0
  %v245 = vand.u32 %v101, 4294901760
  %v246 = vsub.f32 %v101, %v245
  %v247 = vand.u32 %v246, 4294901760
  %v248 = vsub.f32 %v246, %v247
  %v249 = vand.u32 %v248, 4294901760
  %250 = vmatmul.mubr.f32.gmra.mrb[0].mxu0 %v249
  %v251 = vpop.f32.mrb[0].mxu0
  %v252 = vadd.f32 0.0, %v251
  %v253 = vpop.f32.mrb[0].mxu0
  %254 = vmatprep.mubr.f32.mxu0 0.0
  %v255 = vand.u32 %v102, 4294901760
  %v256 = vsub.f32 %v102, %v255
  %v257 = vand.u32 %v256, 4294901760
  %v258 = vsub.f32 %v256, %v257
  %v259 = vand.u32 %v258, 4294901760
  %260 = vmatmul.mubr.f32.gmra.mrb[0].mxu0 %v259
  %v261 = vpop.f32.mrb[0].mxu0
  %v262 = vadd.f32 0.0, %v261
  %v263 = vpop.f32.mrb[0].mxu0
  %264 = vmatprep.mubr.f32.mxu0 0.0
  %v265 = vand.u32 %v103, 4294901760
  %v266 = vsub.f32 %v103, %v265
  %v267 = vand.u32 %v266, 4294901760
  %v268 = vsub.f32 %v266, %v267
  %v269 = vand.u32 %v268, 4294901760
  %270 = vmatmul.mubr.f32.gmra.mrb[0].mxu0 %v269
  %v271 = vpop.f32.mrb[0].mxu0
  %v272 = vadd.f32 0.0, %v271
  %v273 = vpop.f32.mrb[0].mxu0
  %274 = vmatprep.mubr.f32.mxu0 0.0
  %v275 = vand.u32 %v104, 4294901760
  %v276 = vsub.f32 %v104, %v275
  %v277 = vand.u32 %v276, 4294901760
  %v278 = vsub.f32 %v276, %v277
  %v279 = vand.u32 %v278, 4294901760
  %280 = vmatmul.mubr.f32.gmra.mrb[0].mxu0 %v279
  %v281 = vpop.f32.mrb[0].mxu0
  %v282 = vadd.f32 0.0, %v281
  %v283 = vpop.f32.mrb[0].mxu0
  %284 = vmatprep.mubr.f32.mxu0 0.0
  %v285 = vand.u32 %v105, 4294901760
  %v286 = vsub.f32 %v105, %v285
  %v287 = vand.u32 %v286, 4294901760
  %v288 = vsub.f32 %v286, %v287
  %v289 = vand.u32 %v288, 4294901760
  %290 = vmatmul.mubr.f32.gmra.mrb[0].mxu0 %v289
  %v291 = vpop.f32.mrb[0].mxu0
  %v292 = vadd.f32 0.0, %v291
  %v293 = vpop.f32.mrb[0].mxu0
  %294 = vmatprep.mubr.f32.mxu0 0.0
  %v295 = vand.u32 %v106, 4294901760
  %v296 = vsub.f32 %v106, %v295
  %v297 = vand.u32 %v296, 4294901760
  %v298 = vsub.f32 %v296, %v297
  %v299 = vand.u32 %v298, 4294901760
  %300 = vmatmul.mubr.f32.gmra.mrb[0].mxu0 %v299
  %v301 = vpop.f32.mrb[0].mxu0
  %v302 = vadd.f32 0.0, %v301
  %v303 = vpop.f32.mrb[0].mxu0
  %304 = vmatprep.mubr.f32.mxu0 0.0
  %v305 = vand.u32 %v107, 4294901760
  %v306 = vsub.f32 %v107, %v305
  %v307 = vand.u32 %v306, 4294901760
  %v308 = vsub.f32 %v306, %v307
  %v309 = vand.u32 %v308, 4294901760
  %310 = vmatmul.mubr.f32.gmra.mrb[0].mxu0 %v309
  %v311 = vpop.f32.mrb[0].mxu0
  %v312 = vadd.f32 0.0, %v311
  %v313 = vpop.f32.mrb[0].mxu0
  %314 = vmatprep.mubr.f32.mxu0 0.0
  %v315 = vand.u32 %v108, 4294901760
  %v316 = vsub.f32 %v108, %v315
  %v317 = vand.u32 %v316, 4294901760
  %v318 = vsub.f32 %v316, %v317
  %v319 = vand.u32 %v318, 4294901760
  %320 = vmatmul.mubr.f32.gmra.mrb[0].mxu0 %v319
  %v321 = vpop.f32.mrb[0].mxu0
  %v322 = vadd.f32 0.0, %v321
  %v323 = vpop.f32.mrb[0].mxu0
  %324 = vmatprep.mubr.f32.mxu0 0.0
  %v325 = vand.u32 %v109, 4294901760
  %v326 = vsub.f32 %v109, %v325
  %v327 = vand.u32 %v326, 4294901760
  %v328 = vsub.f32 %v326, %v327
  %v329 = vand.u32 %v328, 4294901760
  %330 = vmatmul.mubr.f32.gmra.mrb[0].mxu0 %v329
  %v331 = vpop.f32.mrb[0].mxu0
  %v332 = vadd.f32 0.0, %v331
  %v333 = vpop.f32.mrb[0].mxu0
  %334 = vdwg.mxu0
  %335 = vmatprep.subr.mxu0 0.0
  %336 = vmatpush1.msra.mxu0 0.0
  %337 = vmatprep.subr.mxu0 0.0
  %338 = vmatpush1.msra.mxu0 0.0
  %339 = vmatprep.subr.mxu0 0.0
  %340 = vmatpush1.msra.mxu0 0.0
  %341 = vmatprep.subr.mxu0 0.0
  %342 = vmatpush1.msra.mxu0 0.0
  %343 = vmatprep.subr.mxu0 0.0
  %344 = vmatpush1.msra.mxu0 0.0
  %345 = vmatprep.subr.mxu0 0.0
  %346 = vmatpush1.msra.mxu0 0.0
  %347 = vmatprep.subr.mxu0 0.0
  %348 = vmatpush1.msra.mxu0 0.0
  %349 = vmatprep.subr.mxu0 0.0
  %350 = vmatpush1.msra.mxu0 0.0
  %351 = vmatprep.subr.mxu0 0.0
  %352 = vmatpush1.msra.mxu0 0.0
  %353 = vmatprep.subr.mxu0 0.0
  %354 = vmatpush1.msra.mxu0 0.0
  %355 = vmatprep.subr.mxu0 0.0
  %356 = vmatpush1.msra.mxu0 0.0
  %357 = vmatprep.subr.mxu0 0.0
  %358 = vmatpush1.msra.mxu0 0.0
  %359 = vmatprep.subr.mxu0 0.0
  %360 = vmatpush1.msra.mxu0 0.0
  %361 = vmatprep.subr.mxu0 0.0
  %362 = vmatpush1.msra.mxu0 0.0
  %363 = vmatprep.subr.mxu0 0.0
  %364 = vmatpush1.msra.mxu0 0.0
  %365 = vmatprep.subr.mxu0 0.0
  %366 = vmatpush1.msra.mxu0 0.0
  %367 = vmatprep.subr.mxu0 0.0
  %368 = vmatpush1.msra.mxu0 0.0
  %369 = vmatprep.subr.mxu0 0.0
  %370 = vmatpush1.msra.mxu0 0.0
  %371 = vmatprep.subr.mxu0 0.0
  %372 = vmatpush1.msra.mxu0 0.0
  %373 = vmatprep.subr.mxu0 0.0
  %374 = vmatpush1.msra.mxu0 0.0
  %375 = vmatprep.subr.mxu0 0.0
  %376 = vmatpush1.msra.mxu0 0.0
  %377 = vmatprep.subr.mxu0 0.0
  %378 = vmatpush1.msra.mxu0 0.0
  %379 = vmatprep.subr.mxu0 0.0
  %380 = vmatpush1.msra.mxu0 0.0
  %381 = vmatprep.subr.mxu0 0.0
  %382 = vmatpush1.msra.mxu0 0.0
  %383 = vmatprep.subr.mxu0 0.0
  %384 = vmatpush1.msra.mxu0 0.0
  %385 = vmatprep.subr.mxu0 0.0
  %386 = vmatpush1.msra.mxu0 0.0
  %387 = vmatprep.subr.mxu0 0.0
  %388 = vmatpush1.msra.mxu0 0.0
  %389 = vmatprep.subr.mxu0 0.0
  %390 = vmatpush1.msra.mxu0 0.0
  %391 = vmatprep.subr.mxu0 0.0
  %392 = vmatpush1.msra.mxu0 0.0
  %393 = vmatprep.subr.mxu0 0.0
  %394 = vmatpush1.msra.mxu0 0.0
  %395 = vmatprep.subr.mxu0 0.0
  %396 = vmatpush1.msra.mxu0 0.0
  %397 = vmatprep.subr.mxu0 0.0
  %398 = vmatpush1.msra.mxu0 0.0
  %399 = vmatprep.mubr.f32.mxu0 0.0
  %v400 = vand.u32 %v94, 4294901760
  %401 = vmatmul.mubr.f32.gmra.mrb[0].mxu0 %v400
  %v402 = vpop.f32.mrb[0].mxu0
  %v403 = vadd.f32 %v182, %v402
  %v404 = vpop.f32.mrb[0].mxu0
  %405 = vmatprep.mubr.f32.mxu0 0.0
  %v406 = vand.u32 %v95, 4294901760
  %407 = vmatmul.mubr.f32.gmra.mrb[0].mxu0 %v406
  %v408 = vpop.f32.mrb[0].mxu0
  %v409 = vadd.f32 %v192, %v408
  %v410 = vpop.f32.mrb[0].mxu0
  %411 = vmatprep.mubr.f32.mxu0 0.0
  %v412 = vand.u32 %v96, 4294901760
  %413 = vmatmul.mubr.f32.gmra.mrb[0].mxu0 %v412
  %v414 = vpop.f32.mrb[0].mxu0
  %v415 = vadd.f32 %v202, %v414
  %v416 = vpop.f32.mrb[0].mxu0
  %417 = vmatprep.mubr.f32.mxu0 0.0
  %v418 = vand.u32 %v97, 4294901760
  %419 = vmatmul.mubr.f32.gmra.mrb[0].mxu0 %v418
  %v420 = vpop.f32.mrb[0].mxu0
  %v421 = vadd.f32 %v212, %v420
  %v422 = vpop.f32.mrb[0].mxu0
  %423 = vmatprep.mubr.f32.mxu0 0.0
  %v424 = vand.u32 %v98, 4294901760
  %425 = vmatmul.mubr.f32.gmra.mrb[0].mxu0 %v424
  %v426 = vpop.f32.mrb[0].mxu0
  %v427 = vadd.f32 %v222, %v426
  %v428 = vpop.f32.mrb[0].mxu0
  %429 = vmatprep.mubr.f32.mxu0 0.0
  %v430 = vand.u32 %v99, 4294901760
  %431 = vmatmul.mubr.f32.gmra.mrb[0].mxu0 %v430
  %v432 = vpop.f32.mrb[0].mxu0
  %v433 = vadd.f32 %v232, %v432
  %v434 = vpop.f32.mrb[0].mxu0
  %435 = vmatprep.mubr.f32.mxu0 0.0
  %v436 = vand.u32 %v100, 4294901760
  %437 = vmatmul.mubr.f32.gmra.mrb[0].mxu0 %v436
  %v438 = vpop.f32.mrb[0].mxu0
  %v439 = vadd.f32 %v242, %v438
  %v440 = vpop.f32.mrb[0].mxu0
  %441 = vmatprep.mubr.f32.mxu0 0.0
  %v442 = vand.u32 %v101, 4294901760
  %443 = vmatmul.mubr.f32.gmra.mrb[0].mxu0 %v442
  %v444 = vpop.f32.mrb[0].mxu0
  %v445 = vadd.f32 %v252, %v444
  %v446 = vpop.f32.mrb[0].mxu0
  %447 = vmatprep.mubr.f32.mxu0 0.0
  %v448 = vand.u32 %v102, 4294901760
  %449 = vmatmul.mubr.f32.gmra.mrb[0].mxu0 %v448
  %v450 = vpop.f32.mrb[0].mxu0
  %v451 = vadd.f32 %v262, %v450
  %v452 = vpop.f32.mrb[0].mxu0
  %453 = vmatprep.mubr.f32.mxu0 0.0
  %v454 = vand.u32 %v103, 4294901760
  %455 = vmatmul.mubr.f32.gmra.mrb[0].mxu0 %v454
  %v456 = vpop.f32.mrb[0].mxu0
  %v457 = vadd.f32 %v272, %v456
  %v458 = vpop.f32.mrb[0].mxu0
  %459 = vmatprep.mubr.f32.mxu0 0.0
  %v460 = vand.u32 %v104, 4294901760
  %461 = vmatmul.mubr.f32.gmra.mrb[0].mxu0 %v460
  %v462 = vpop.f32.mrb[0].mxu0
  %v463 = vadd.f32 %v282, %v462
  %v464 = vpop.f32.mrb[0].mxu0
  %465 = vmatprep.mubr.f32.mxu0 0.0
  %v466 = vand.u32 %v105, 4294901760
  %467 = vmatmul.mubr.f32.gmra.mrb[0].mxu0 %v466
  %v468 = vpop.f32.mrb[0].mxu0
  %v469 = vadd.f32 %v292, %v468
  %v470 = vpop.f32.mrb[0].mxu0
  %471 = vmatprep.mubr.f32.mxu0 0.0
  %v472 = vand.u32 %v106, 4294901760
  %473 = vmatmul.mubr.f32.gmra.mrb[0].mxu0 %v472
  %v474 = vpop.f32.mrb[0].mxu0
  %v475 = vadd.f32 %v302, %v474
  %v476 = vpop.f32.mrb[0].mxu0
  %477 = vmatprep.mubr.f32.mxu0 0.0
  %v478 = vand.u32 %v107, 4294901760
  %479 = vmatmul.mubr.f32.gmra.mrb[0].mxu0 %v478
  %v480 = vpop.f32.mrb[0].mxu0
  %v481 = vadd.f32 %v312, %v480
  %v482 = vpop.f32.mrb[0].mxu0
  %483 = vmatprep.mubr.f32.mxu0 0.0
  %v484 = vand.u32 %v108, 4294901760
  %485 = vmatmul.mubr.f32.gmra.mrb[0].mxu0 %v484
  %v486 = vpop.f32.mrb[0].mxu0
  %v487 = vadd.f32 %v322, %v486
  %v488 = vpop.f32.mrb[0].mxu0
  %489 = vmatprep.mubr.f32.mxu0 0.0
  %v490 = vand.u32 %v109, 4294901760
  %491 = vmatmul.mubr.f32.gmra.mrb[0].mxu0 %v490
  %v492 = vpop.f32.mrb[0].mxu0
  %v493 = vadd.f32 %v332, %v492
  %v494 = vpop.f32.mrb[0].mxu0
  %495 = vdwg.mxu0
  %496 = vmatprep.subr.mxu0 0.0
  %497 = vmatpush1.msra.mxu0 0.0
  %498 = vmatprep.subr.mxu0 0.0
  %499 = vmatpush1.msra.mxu0 0.0
  %500 = vmatprep.subr.mxu0 0.0
  %501 = vmatpush1.msra.mxu0 0.0
  %502 = vmatprep.subr.mxu0 0.0
  %503 = vmatpush1.msra.mxu0 0.0
  %504 = vmatprep.subr.mxu0 0.0
  %505 = vmatpush1.msra.mxu0 0.0
  %506 = vmatprep.subr.mxu0 0.0
  %507 = vmatpush1.msra.mxu0 0.0
  %508 = vmatprep.subr.mxu0 0.0
  %509 = vmatpush1.msra.mxu0 0.0
  %510 = vmatprep.subr.mxu0 0.0
  %511 = vmatpush1.msra.mxu0 0.0
  %512 = vmatprep.subr.mxu0 0.0
  %513 = vmatpush1.msra.mxu0 0.0
  %514 = vmatprep.subr.mxu0 0.0
  %515 = vmatpush1.msra.mxu0 0.0
  %516 = vmatprep.subr.mxu0 0.0
  %517 = vmatpush1.msra.mxu0 0.0
  %518 = vmatprep.subr.mxu0 0.0
  %519 = vmatpush1.msra.mxu0 0.0
  %520 = vmatprep.subr.mxu0 0.0
  %521 = vmatpush1.msra.mxu0 0.0
  %522 = vmatprep.subr.mxu0 0.0
  %523 = vmatpush1.msra.mxu0 0.0
  %524 = vmatprep.subr.mxu0 0.0
  %525 = vmatpush1.msra.mxu0 0.0
  %526 = vmatprep.subr.mxu0 0.0
  %527 = vmatpush1.msra.mxu0 0.0
  %528 = vmatprep.subr.mxu0 0.0
  %529 = vmatpush1.msra.mxu0 0.0
  %530 = vmatprep.subr.mxu0 0.0
  %531 = vmatpush1.msra.mxu0 0.0
  %532 = vmatprep.subr.mxu0 0.0
  %533 = vmatpush1.msra.mxu0 0.0
  %534 = vmatprep.subr.mxu0 0.0
  %535 = vmatpush1.msra.mxu0 0.0
  %536 = vmatprep.subr.mxu0 0.0
  %537 = vmatpush1.msra.mxu0 0.0
  %538 = vmatprep.subr.mxu0 0.0
  %539 = vmatpush1.msra.mxu0 0.0
  %540 = vmatprep.subr.mxu0 0.0
  %541 = vmatpush1.msra.mxu0 0.0
  %542 = vmatprep.subr.mxu0 0.0
  %543 = vmatpush1.msra.mxu0 0.0
  %544 = vmatprep.subr.mxu0 0.0
  %545 = vmatpush1.msra.mxu0 0.0
  %546 = vmatprep.subr.mxu0 0.0
  %547 = vmatpush1.msra.mxu0 0.0
  %548 = vmatprep.subr.mxu0 0.0
  %549 = vmatpush1.msra.mxu0 0.0
  %550 = vmatprep.subr.mxu0 0.0
  %551 = vmatpush1.msra.mxu0 0.0
  %552 = vmatprep.subr.mxu0 0.0
  %553 = vmatpush1.msra.mxu0 0.0
  %554 = vmatprep.subr.mxu0 0.0
  %555 = vmatpush1.msra.mxu0 0.0
  %556 = vmatprep.subr.mxu0 0.0
  %557 = vmatpush1.msra.mxu0 0.0
  %558 = vmatprep.subr.mxu0 0.0
  %559 = vmatpush1.msra.mxu0 0.0
  %560 = vmatprep.mubr.f32.mxu0 0.0
  %v561 = vand.u32 %v94, 4294901760
  %v562 = vsub.f32 %v94, %v561
  %563 = vmatmul.mubr.f32.gmra.mrb[0].mxu0 %v562
  %v564 = vpop.f32.mrb[0].mxu0
  %v565 = vadd.f32 %v403, %v564
  %v566 = vpop.f32.mrb[0].mxu0
  %567 = vmatprep.mubr.f32.mxu0 0.0
  %v568 = vand.u32 %v95, 4294901760
  %v569 = vsub.f32 %v95, %v568
  %570 = vmatmul.mubr.f32.gmra.mrb[0].mxu0 %v569
  %v571 = vpop.f32.mrb[0].mxu0
  %v572 = vadd.f32 %v409, %v571
  %v573 = vpop.f32.mrb[0].mxu0
  %574 = vmatprep.mubr.f32.mxu0 0.0
  %v575 = vand.u32 %v96, 4294901760
  %v576 = vsub.f32 %v96, %v575
  %577 = vmatmul.mubr.f32.gmra.mrb[0].mxu0 %v576
  %v578 = vpop.f32.mrb[0].mxu0
  %v579 = vadd.f32 %v415, %v578
  %v580 = vpop.f32.mrb[0].mxu0
  %581 = vmatprep.mubr.f32.mxu0 0.0
  %v582 = vand.u32 %v97, 4294901760
  %v583 = vsub.f32 %v97, %v582
  %584 = vmatmul.mubr.f32.gmra.mrb[0].mxu0 %v583
  %v585 = vpop.f32.mrb[0].mxu0
  %v586 = vadd.f32 %v421, %v585
  %v587 = vpop.f32.mrb[0].mxu0
  %588 = vmatprep.mubr.f32.mxu0 0.0
  %v589 = vand.u32 %v98, 4294901760
  %v590 = vsub.f32 %v98, %v589
  %591 = vmatmul.mubr.f32.gmra.mrb[0].mxu0 %v590
  %v592 = vpop.f32.mrb[0].mxu0
  %v593 = vadd.f32 %v427, %v592
  %v594 = vpop.f32.mrb[0].mxu0
  %595 = vmatprep.mubr.f32.mxu0 0.0
  %v596 = vand.u32 %v99, 4294901760
  %v597 = vsub.f32 %v99, %v596
  %598 = vmatmul.mubr.f32.gmra.mrb[0].mxu0 %v597
  %v599 = vpop.f32.mrb[0].mxu0
  %v600 = vadd.f32 %v433, %v599
  %v601 = vpop.f32.mrb[0].mxu0
  %602 = vmatprep.mubr.f32.mxu0 0.0
  %v603 = vand.u32 %v100, 4294901760
  %v604 = vsub.f32 %v100, %v603
  %605 = vmatmul.mubr.f32.gmra.mrb[0].mxu0 %v604
  %v606 = vpop.f32.mrb[0].mxu0
  %v607 = vadd.f32 %v439, %v606
  %v608 = vpop.f32.mrb[0].mxu0
  %609 = vmatprep.mubr.f32.mxu0 0.0
  %v610 = vand.u32 %v101, 4294901760
  %v611 = vsub.f32 %v101, %v610
  %612 = vmatmul.mubr.f32.gmra.mrb[0].mxu0 %v611
  %v613 = vpop.f32.mrb[0].mxu0
  %v614 = vadd.f32 %v445, %v613
  %v615 = vpop.f32.mrb[0].mxu0
  %616 = vmatprep.mubr.f32.mxu0 0.0
  %v617 = vand.u32 %v102, 4294901760
  %v618 = vsub.f32 %v102, %v617
  %619 = vmatmul.mubr.f32.gmra.mrb[0].mxu0 %v618
  %v620 = vpop.f32.mrb[0].mxu0
  %v621 = vadd.f32 %v451, %v620
  %v622 = vpop.f32.mrb[0].mxu0
  %623 = vmatprep.mubr.f32.mxu0 0.0
  %v624 = vand.u32 %v103, 4294901760
  %v625 = vsub.f32 %v103, %v624
  %626 = vmatmul.mubr.f32.gmra.mrb[0].mxu0 %v625
  %v627 = vpop.f32.mrb[0].mxu0
  %v628 = vadd.f32 %v457, %v627
  %v629 = vpop.f32.mrb[0].mxu0
  %630 = vmatprep.mubr.f32.mxu0 0.0
  %v631 = vand.u32 %v104, 4294901760
  %v632 = vsub.f32 %v104, %v631
  %633 = vmatmul.mubr.f32.gmra.mrb[0].mxu0 %v632
  %v634 = vpop.f32.mrb[0].mxu0
  %v635 = vadd.f32 %v463, %v634
  %v636 = vpop.f32.mrb[0].mxu0
  %637 = vmatprep.mubr.f32.mxu0 0.0
  %v638 = vand.u32 %v105, 4294901760
  %v639 = vsub.f32 %v105, %v638
  %640 = vmatmul.mubr.f32.gmra.mrb[0].mxu0 %v639
  %v641 = vpop.f32.mrb[0].mxu0
  %v642 = vadd.f32 %v469, %v641
  %v643 = vpop.f32.mrb[0].mxu0
  %644 = vmatprep.mubr.f32.mxu0 0.0
  %v645 = vand.u32 %v106, 4294901760
  %v646 = vsub.f32 %v106, %v645
  %647 = vmatmul.mubr.f32.gmra.mrb[0].mxu0 %v646
  %v648 = vpop.f32.mrb[0].mxu0
  %v649 = vadd.f32 %v475, %v648
  %v650 = vpop.f32.mrb[0].mxu0
  %651 = vmatprep.mubr.f32.mxu0 0.0
  %v652 = vand.u32 %v107, 4294901760
  %v653 = vsub.f32 %v107, %v652
  %654 = vmatmul.mubr.f32.gmra.mrb[0].mxu0 %v653
  %v655 = vpop.f32.mrb[0].mxu0
  %v656 = vadd.f32 %v481, %v655
  %v657 = vpop.f32.mrb[0].mxu0
  %658 = vmatprep.mubr.f32.mxu0 0.0
  %v659 = vand.u32 %v108, 4294901760
  %v660 = vsub.f32 %v108, %v659
  %661 = vmatmul.mubr.f32.gmra.mrb[0].mxu0 %v660
  %v662 = vpop.f32.mrb[0].mxu0
  %v663 = vadd.f32 %v487, %v662
  %v664 = vpop.f32.mrb[0].mxu0
  %665 = vmatprep.mubr.f32.mxu0 0.0
  %v666 = vand.u32 %v109, 4294901760
  %v667 = vsub.f32 %v109, %v666
  %668 = vmatmul.mubr.f32.gmra.mrb[0].mxu0 %v667
  %v669 = vpop.f32.mrb[0].mxu0
  %v670 = vadd.f32 %v493, %v669
  %v671 = vpop.f32.mrb[0].mxu0
  %672 = vdwg.mxu0
  %673 = vmatprep.subr.mxu0 0.0
  %674 = vmatpush1.msra.mxu0 1.0
  %675 = vmatprep.subr.mxu0 0.0
  %676 = vmatpush1.msra.mxu0 1.0
  %677 = vmatprep.subr.mxu0 0.0
  %678 = vmatpush1.msra.mxu0 1.0
  %679 = vmatprep.subr.mxu0 0.0
  %680 = vmatpush1.msra.mxu0 1.0
  %681 = vmatprep.subr.mxu0 0.0
  %682 = vmatpush1.msra.mxu0 1.0
  %683 = vmatprep.subr.mxu0 0.0
  %684 = vmatpush1.msra.mxu0 1.0
  %685 = vmatprep.subr.mxu0 0.0
  %686 = vmatpush1.msra.mxu0 1.0
  %687 = vmatprep.subr.mxu0 0.0
  %688 = vmatpush1.msra.mxu0 1.0
  %689 = vmatprep.subr.mxu0 0.0
  %690 = vmatpush1.msra.mxu0 1.0
  %691 = vmatprep.subr.mxu0 0.0
  %692 = vmatpush1.msra.mxu0 1.0
  %693 = vmatprep.subr.mxu0 0.0
  %694 = vmatpush1.msra.mxu0 1.0
  %695 = vmatprep.subr.mxu0 0.0
  %696 = vmatpush1.msra.mxu0 1.0
  %697 = vmatprep.subr.mxu0 0.0
  %698 = vmatpush1.msra.mxu0 1.0
  %699 = vmatprep.subr.mxu0 0.0
  %700 = vmatpush1.msra.mxu0 1.0
  %701 = vmatprep.subr.mxu0 0.0
  %702 = vmatpush1.msra.mxu0 1.0
  %703 = vmatprep.subr.mxu0 0.0
  %704 = vmatpush1.msra.mxu0 1.0
  %705 = vmatprep.subr.mxu0 0.0
  %706 = vmatpush1.msra.mxu0 0.0
  %707 = vmatprep.subr.mxu0 0.0
  %708 = vmatpush1.msra.mxu0 0.0
  %709 = vmatprep.subr.mxu0 0.0
  %710 = vmatpush1.msra.mxu0 0.0
  %711 = vmatprep.subr.mxu0 0.0
  %712 = vmatpush1.msra.mxu0 0.0
  %713 = vmatprep.subr.mxu0 0.0
  %714 = vmatpush1.msra.mxu0 0.0
  %715 = vmatprep.subr.mxu0 0.0
  %716 = vmatpush1.msra.mxu0 0.0
  %717 = vmatprep.subr.mxu0 0.0
  %718 = vmatpush1.msra.mxu0 0.0
  %719 = vmatprep.subr.mxu0 0.0
  %720 = vmatpush1.msra.mxu0 0.0
  %721 = vmatprep.subr.mxu0 0.0
  %722 = vmatpush1.msra.mxu0 0.0
  %723 = vmatprep.subr.mxu0 0.0
  %724 = vmatpush1.msra.mxu0 0.0
  %725 = vmatprep.subr.mxu0 0.0
  %726 = vmatpush1.msra.mxu0 0.0
  %727 = vmatprep.subr.mxu0 0.0
  %728 = vmatpush1.msra.mxu0 0.0
  %729 = vmatprep.subr.mxu0 0.0
  %730 = vmatpush1.msra.mxu0 0.0
  %731 = vmatprep.subr.mxu0 0.0
  %732 = vmatpush1.msra.mxu0 0.0
  %733 = vmatprep.subr.mxu0 0.0
  %734 = vmatpush1.msra.mxu0 0.0
  %735 = vmatprep.subr.mxu0 0.0
  %736 = vmatpush1.msra.mxu0 0.0
  %737 = vmatprep.mubr.f32.mxu0 0.0
  %v738 = vand.u32 %v94, 4294901760
  %v739 = vsub.f32 %v94, %v738
  %v740 = vand.u32 %v739, 4294901760
  %741 = vmatmul.mubr.f32.gmra.mrb[0].mxu0 %v740
  %v742 = vpop.f32.mrb[0].mxu0
  %v743 = vadd.f32 %v565, %v742
  %v744 = vpop.f32.mrb[0].mxu0
  %745 = vmatprep.mubr.f32.mxu0 0.0
  %v746 = vand.u32 %v95, 4294901760
  %v747 = vsub.f32 %v95, %v746
  %v748 = vand.u32 %v747, 4294901760
  %749 = vmatmul.mubr.f32.gmra.mrb[0].mxu0 %v748
  %v750 = vpop.f32.mrb[0].mxu0
  %v751 = vadd.f32 %v572, %v750
  %v752 = vpop.f32.mrb[0].mxu0
  %753 = vmatprep.mubr.f32.mxu0 0.0
  %v754 = vand.u32 %v96, 4294901760
  %v755 = vsub.f32 %v96, %v754
  %v756 = vand.u32 %v755, 4294901760
  %757 = vmatmul.mubr.f32.gmra.mrb[0].mxu0 %v756
  %v758 = vpop.f32.mrb[0].mxu0
  %v759 = vadd.f32 %v579, %v758
  %v760 = vpop.f32.mrb[0].mxu0
  %761 = vmatprep.mubr.f32.mxu0 0.0
  %v762 = vand.u32 %v97, 4294901760
  %v763 = vsub.f32 %v97, %v762
  %v764 = vand.u32 %v763, 4294901760
  %765 = vmatmul.mubr.f32.gmra.mrb[0].mxu0 %v764
  %v766 = vpop.f32.mrb[0].mxu0
  %v767 = vadd.f32 %v586, %v766
  %v768 = vpop.f32.mrb[0].mxu0
  %769 = vmatprep.mubr.f32.mxu0 0.0
  %v770 = vand.u32 %v98, 4294901760
  %v771 = vsub.f32 %v98, %v770
  %v772 = vand.u32 %v771, 4294901760
  %773 = vmatmul.mubr.f32.gmra.mrb[0].mxu0 %v772
  %v774 = vpop.f32.mrb[0].mxu0
  %v775 = vadd.f32 %v593, %v774
  %v776 = vpop.f32.mrb[0].mxu0
  %777 = vmatprep.mubr.f32.mxu0 0.0
  %v778 = vand.u32 %v99, 4294901760
  %v779 = vsub.f32 %v99, %v778
  %v780 = vand.u32 %v779, 4294901760
  %781 = vmatmul.mubr.f32.gmra.mrb[0].mxu0 %v780
  %v782 = vpop.f32.mrb[0].mxu0
  %v783 = vadd.f32 %v600, %v782
  %v784 = vpop.f32.mrb[0].mxu0
  %785 = vmatprep.mubr.f32.mxu0 0.0
  %v786 = vand.u32 %v100, 4294901760
  %v787 = vsub.f32 %v100, %v786
  %v788 = vand.u32 %v787, 4294901760
  %789 = vmatmul.mubr.f32.gmra.mrb[0].mxu0 %v788
  %v790 = vpop.f32.mrb[0].mxu0
  %v791 = vadd.f32 %v607, %v790
  %v792 = vpop.f32.mrb[0].mxu0
  %793 = vmatprep.mubr.f32.mxu0 0.0
  %v794 = vand.u32 %v101, 4294901760
  %v795 = vsub.f32 %v101, %v794
  %v796 = vand.u32 %v795, 4294901760
  %797 = vmatmul.mubr.f32.gmra.mrb[0].mxu0 %v796
  %v798 = vpop.f32.mrb[0].mxu0
  %v799 = vadd.f32 %v614, %v798
  %v800 = vpop.f32.mrb[0].mxu0
  %801 = vmatprep.mubr.f32.mxu0 0.0
  %v802 = vand.u32 %v102, 4294901760
  %v803 = vsub.f32 %v102, %v802
  %v804 = vand.u32 %v803, 4294901760
  %805 = vmatmul.mubr.f32.gmra.mrb[0].mxu0 %v804
  %v806 = vpop.f32.mrb[0].mxu0
  %v807 = vadd.f32 %v621, %v806
  %v808 = vpop.f32.mrb[0].mxu0
  %809 = vmatprep.mubr.f32.mxu0 0.0
  %v810 = vand.u32 %v103, 4294901760
  %v811 = vsub.f32 %v103, %v810
  %v812 = vand.u32 %v811, 4294901760
  %813 = vmatmul.mubr.f32.gmra.mrb[0].mxu0 %v812
  %v814 = vpop.f32.mrb[0].mxu0
  %v815 = vadd.f32 %v628, %v814
  %v816 = vpop.f32.mrb[0].mxu0
  %817 = vmatprep.mubr.f32.mxu0 0.0
  %v818 = vand.u32 %v104, 4294901760
  %v819 = vsub.f32 %v104, %v818
  %v820 = vand.u32 %v819, 4294901760
  %821 = vmatmul.mubr.f32.gmra.mrb[0].mxu0 %v820
  %v822 = vpop.f32.mrb[0].mxu0
  %v823 = vadd.f32 %v635, %v822
  %v824 = vpop.f32.mrb[0].mxu0
  %825 = vmatprep.mubr.f32.mxu0 0.0
  %v826 = vand.u32 %v105, 4294901760
  %v827 = vsub.f32 %v105, %v826
  %v828 = vand.u32 %v827, 4294901760
  %829 = vmatmul.mubr.f32.gmra.mrb[0].mxu0 %v828
  %v830 = vpop.f32.mrb[0].mxu0
  %v831 = vadd.f32 %v642, %v830
  %v832 = vpop.f32.mrb[0].mxu0
  %833 = vmatprep.mubr.f32.mxu0 0.0
  %v834 = vand.u32 %v106, 4294901760
  %v835 = vsub.f32 %v106, %v834
  %v836 = vand.u32 %v835, 4294901760
  %837 = vmatmul.mubr.f32.gmra.mrb[0].mxu0 %v836
  %v838 = vpop.f32.mrb[0].mxu0
  %v839 = vadd.f32 %v649, %v838
  %v840 = vpop.f32.mrb[0].mxu0
  %841 = vmatprep.mubr.f32.mxu0 0.0
  %v842 = vand.u32 %v107, 4294901760
  %v843 = vsub.f32 %v107, %v842
  %v844 = vand.u32 %v843, 4294901760
  %845 = vmatmul.mubr.f32.gmra.mrb[0].mxu0 %v844
  %v846 = vpop.f32.mrb[0].mxu0
  %v847 = vadd.f32 %v656, %v846
  %v848 = vpop.f32.mrb[0].mxu0
  %849 = vmatprep.mubr.f32.mxu0 0.0
  %v850 = vand.u32 %v108, 4294901760
  %v851 = vsub.f32 %v108, %v850
  %v852 = vand.u32 %v851, 4294901760
  %853 = vmatmul.mubr.f32.gmra.mrb[0].mxu0 %v852
  %v854 = vpop.f32.mrb[0].mxu0
  %v855 = vadd.f32 %v663, %v854
  %v856 = vpop.f32.mrb[0].mxu0
  %857 = vmatprep.mubr.f32.mxu0 0.0
  %v858 = vand.u32 %v109, 4294901760
  %v859 = vsub.f32 %v109, %v858
  %v860 = vand.u32 %v859, 4294901760
  %861 = vmatmul.mubr.f32.gmra.mrb[0].mxu0 %v860
  %v862 = vpop.f32.mrb[0].mxu0
  %v863 = vadd.f32 %v670, %v862
  %v864 = vpop.f32.mrb[0].mxu0
  %865 = vdwg.mxu0
  %866 = vmatprep.subr.mxu0 0.0
  %867 = vmatpush1.msra.mxu0 0.0
  %868 = vmatprep.subr.mxu0 0.0
  %869 = vmatpush1.msra.mxu0 0.0
  %870 = vmatprep.subr.mxu0 0.0
  %871 = vmatpush1.msra.mxu0 0.0
  %872 = vmatprep.subr.mxu0 0.0
  %873 = vmatpush1.msra.mxu0 0.0
  %874 = vmatprep.subr.mxu0 0.0
  %875 = vmatpush1.msra.mxu0 0.0
  %876 = vmatprep.subr.mxu0 0.0
  %877 = vmatpush1.msra.mxu0 0.0
  %878 = vmatprep.subr.mxu0 0.0
  %879 = vmatpush1.msra.mxu0 0.0
  %880 = vmatprep.subr.mxu0 0.0
  %881 = vmatpush1.msra.mxu0 0.0
  %882 = vmatprep.subr.mxu0 0.0
  %883 = vmatpush1.msra.mxu0 0.0
  %884 = vmatprep.subr.mxu0 0.0
  %885 = vmatpush1.msra.mxu0 0.0
  %886 = vmatprep.subr.mxu0 0.0
  %887 = vmatpush1.msra.mxu0 0.0
  %888 = vmatprep.subr.mxu0 0.0
  %889 = vmatpush1.msra.mxu0 0.0
  %890 = vmatprep.subr.mxu0 0.0
  %891 = vmatpush1.msra.mxu0 0.0
  %892 = vmatprep.subr.mxu0 0.0
  %893 = vmatpush1.msra.mxu0 0.0
  %894 = vmatprep.subr.mxu0 0.0
  %895 = vmatpush1.msra.mxu0 0.0
  %896 = vmatprep.subr.mxu0 0.0
  %897 = vmatpush1.msra.mxu0 0.0
  %898 = vmatprep.subr.mxu0 0.0
  %899 = vmatpush1.msra.mxu0 0.0
  %900 = vmatprep.subr.mxu0 0.0
  %901 = vmatpush1.msra.mxu0 0.0
  %902 = vmatprep.subr.mxu0 0.0
  %903 = vmatpush1.msra.mxu0 0.0
  %904 = vmatprep.subr.mxu0 0.0
  %905 = vmatpush1.msra.mxu0 0.0
  %906 = vmatprep.subr.mxu0 0.0
  %907 = vmatpush1.msra.mxu0 0.0
  %908 = vmatprep.subr.mxu0 0.0
  %909 = vmatpush1.msra.mxu0 0.0
  %910 = vmatprep.subr.mxu0 0.0
  %911 = vmatpush1.msra.mxu0 0.0
  %912 = vmatprep.subr.mxu0 0.0
  %913 = vmatpush1.msra.mxu0 0.0
  %914 = vmatprep.subr.mxu0 0.0
  %915 = vmatpush1.msra.mxu0 0.0
  %916 = vmatprep.subr.mxu0 0.0
  %917 = vmatpush1.msra.mxu0 0.0
  %918 = vmatprep.subr.mxu0 0.0
  %919 = vmatpush1.msra.mxu0 0.0
  %920 = vmatprep.subr.mxu0 0.0
  %921 = vmatpush1.msra.mxu0 0.0
  %922 = vmatprep.subr.mxu0 0.0
  %923 = vmatpush1.msra.mxu0 0.0
  %924 = vmatprep.subr.mxu0 0.0
  %925 = vmatpush1.msra.mxu0 0.0
  %926 = vmatprep.subr.mxu0 0.0
  %927 = vmatpush1.msra.mxu0 0.0
  %928 = vmatprep.subr.mxu0 0.0
  %929 = vmatpush1.msra.mxu0 0.0
  %930 = vmatprep.mubr.f32.mxu0 0.0
  %v931 = vand.u32 %v94, 4294901760
  %932 = vmatmul.mubr.f32.gmra.mrb[0].mxu0 %v931
  %v933 = vpop.f32.mrb[0].mxu0
  %v934 = vadd.f32 %v743, %v933
  %v935 = vpop.f32.mrb[0].mxu0
  %936 = vmatprep.mubr.f32.mxu0 0.0
  %v937 = vand.u32 %v95, 4294901760
  %938 = vmatmul.mubr.f32.gmra.mrb[0].mxu0 %v937
  %v939 = vpop.f32.mrb[0].mxu0
  %v940 = vadd.f32 %v751, %v939
  %v941 = vpop.f32.mrb[0].mxu0
  %942 = vmatprep.mubr.f32.mxu0 0.0
  %v943 = vand.u32 %v96, 4294901760
  %944 = vmatmul.mubr.f32.gmra.mrb[0].mxu0 %v943
  %v945 = vpop.f32.mrb[0].mxu0
  %v946 = vadd.f32 %v759, %v945
  %v947 = vpop.f32.mrb[0].mxu0
  %948 = vmatprep.mubr.f32.mxu0 0.0
  %v949 = vand.u32 %v97, 4294901760
  %950 = vmatmul.mubr.f32.gmra.mrb[0].mxu0 %v949
  %v951 = vpop.f32.mrb[0].mxu0
  %v952 = vadd.f32 %v767, %v951
  %v953 = vpop.f32.mrb[0].mxu0
  %954 = vmatprep.mubr.f32.mxu0 0.0
  %v955 = vand.u32 %v98, 4294901760
  %956 = vmatmul.mubr.f32.gmra.mrb[0].mxu0 %v955
  %v957 = vpop.f32.mrb[0].mxu0
  %v958 = vadd.f32 %v775, %v957
  %v959 = vpop.f32.mrb[0].mxu0
  %960 = vmatprep.mubr.f32.mxu0 0.0
  %v961 = vand.u32 %v99, 4294901760
  %962 = vmatmul.mubr.f32.gmra.mrb[0].mxu0 %v961
  %v963 = vpop.f32.mrb[0].mxu0
  %v964 = vadd.f32 %v783, %v963
  %v965 = vpop.f32.mrb[0].mxu0
  %966 = vmatprep.mubr.f32.mxu0 0.0
  %v967 = vand.u32 %v100, 4294901760
  %968 = vmatmul.mubr.f32.gmra.mrb[0].mxu0 %v967
  %v969 = vpop.f32.mrb[0].mxu0
  %v970 = vadd.f32 %v791, %v969
  %v971 = vpop.f32.mrb[0].mxu0
  %972 = vmatprep.mubr.f32.mxu0 0.0
  %v973 = vand.u32 %v101, 4294901760
  %974 = vmatmul.mubr.f32.gmra.mrb[0].mxu0 %v973
  %v975 = vpop.f32.mrb[0].mxu0
  %v976 = vadd.f32 %v799, %v975
  %v977 = vpop.f32.mrb[0].mxu0
  %978 = vmatprep.mubr.f32.mxu0 0.0
  %v979 = vand.u32 %v102, 4294901760
  %980 = vmatmul.mubr.f32.gmra.mrb[0].mxu0 %v979
  %v981 = vpop.f32.mrb[0].mxu0
  %v982 = vadd.f32 %v807, %v981
  %v983 = vpop.f32.mrb[0].mxu0
  %984 = vmatprep.mubr.f32.mxu0 0.0
  %v985 = vand.u32 %v103, 4294901760
  %986 = vmatmul.mubr.f32.gmra.mrb[0].mxu0 %v985
  %v987 = vpop.f32.mrb[0].mxu0
  %v988 = vadd.f32 %v815, %v987
  %v989 = vpop.f32.mrb[0].mxu0
  %990 = vmatprep.mubr.f32.mxu0 0.0
  %v991 = vand.u32 %v104, 4294901760
  %992 = vmatmul.mubr.f32.gmra.mrb[0].mxu0 %v991
  %v993 = vpop.f32.mrb[0].mxu0
  %v994 = vadd.f32 %v823, %v993
  %v995 = vpop.f32.mrb[0].mxu0
  %996 = vmatprep.mubr.f32.mxu0 0.0
  %v997 = vand.u32 %v105, 4294901760
  %998 = vmatmul.mubr.f32.gmra.mrb[0].mxu0 %v997
  %v999 = vpop.f32.mrb[0].mxu0
  %v1000 = vadd.f32 %v831, %v999
  %v1001 = vpop.f32.mrb[0].mxu0
  %1002 = vmatprep.mubr.f32.mxu0 0.0
  %v1003 = vand.u32 %v106, 4294901760
  %1004 = vmatmul.mubr.f32.gmra.mrb[0].mxu0 %v1003
  %v1005 = vpop.f32.mrb[0].mxu0
  %v1006 = vadd.f32 %v839, %v1005
  %v1007 = vpop.f32.mrb[0].mxu0
  %1008 = vmatprep.mubr.f32.mxu0 0.0
  %v1009 = vand.u32 %v107, 4294901760
  %1010 = vmatmul.mubr.f32.gmra.mrb[0].mxu0 %v1009
  %v1011 = vpop.f32.mrb[0].mxu0
  %v1012 = vadd.f32 %v847, %v1011
  %v1013 = vpop.f32.mrb[0].mxu0
  %1014 = vmatprep.mubr.f32.mxu0 0.0
  %v1015 = vand.u32 %v108, 4294901760
  %1016 = vmatmul.mubr.f32.gmra.mrb[0].mxu0 %v1015
  %v1017 = vpop.f32.mrb[0].mxu0
  %v1018 = vadd.f32 %v855, %v1017
  %v1019 = vpop.f32.mrb[0].mxu0
  %1020 = vmatprep.mubr.f32.mxu0 0.0
  %v1021 = vand.u32 %v109, 4294901760
  %1022 = vmatmul.mubr.f32.gmra.mrb[0].mxu0 %v1021
  %v1023 = vpop.f32.mrb[0].mxu0
  %v1024 = vadd.f32 %v863, %v1023
  %v1025 = vpop.f32.mrb[0].mxu0
  %1026 = vdwg.mxu0
  %1027 = vmatprep.subr.mxu0 0.0
  %1028 = vmatpush1.msra.mxu0 1.0
  %1029 = vmatprep.subr.mxu0 0.0
  %1030 = vmatpush1.msra.mxu0 1.0
  %1031 = vmatprep.subr.mxu0 0.0
  %1032 = vmatpush1.msra.mxu0 1.0
  %1033 = vmatprep.subr.mxu0 0.0
  %1034 = vmatpush1.msra.mxu0 1.0
  %1035 = vmatprep.subr.mxu0 0.0
  %1036 = vmatpush1.msra.mxu0 1.0
  %1037 = vmatprep.subr.mxu0 0.0
  %1038 = vmatpush1.msra.mxu0 1.0
  %1039 = vmatprep.subr.mxu0 0.0
  %1040 = vmatpush1.msra.mxu0 1.0
  %1041 = vmatprep.subr.mxu0 0.0
  %1042 = vmatpush1.msra.mxu0 1.0
  %1043 = vmatprep.subr.mxu0 0.0
  %1044 = vmatpush1.msra.mxu0 1.0
  %1045 = vmatprep.subr.mxu0 0.0
  %1046 = vmatpush1.msra.mxu0 1.0
  %1047 = vmatprep.subr.mxu0 0.0
  %1048 = vmatpush1.msra.mxu0 1.0
  %1049 = vmatprep.subr.mxu0 0.0
  %1050 = vmatpush1.msra.mxu0 1.0
  %1051 = vmatprep.subr.mxu0 0.0
  %1052 = vmatpush1.msra.mxu0 1.0
  %1053 = vmatprep.subr.mxu0 0.0
  %1054 = vmatpush1.msra.mxu0 1.0
  %1055 = vmatprep.subr.mxu0 0.0
  %1056 = vmatpush1.msra.mxu0 1.0
  %1057 = vmatprep.subr.mxu0 0.0
  %1058 = vmatpush1.msra.mxu0 1.0
  %1059 = vmatprep.subr.mxu0 0.0
  %1060 = vmatpush1.msra.mxu0 0.0
  %1061 = vmatprep.subr.mxu0 0.0
  %1062 = vmatpush1.msra.mxu0 0.0
  %1063 = vmatprep.subr.mxu0 0.0
  %1064 = vmatpush1.msra.mxu0 0.0
  %1065 = vmatprep.subr.mxu0 0.0
  %1066 = vmatpush1.msra.mxu0 0.0
  %1067 = vmatprep.subr.mxu0 0.0
  %1068 = vmatpush1.msra.mxu0 0.0
  %1069 = vmatprep.subr.mxu0 0.0
  %1070 = vmatpush1.msra.mxu0 0.0
  %1071 = vmatprep.subr.mxu0 0.0
  %1072 = vmatpush1.msra.mxu0 0.0
  %1073 = vmatprep.subr.mxu0 0.0
  %1074 = vmatpush1.msra.mxu0 0.0
  %1075 = vmatprep.subr.mxu0 0.0
  %1076 = vmatpush1.msra.mxu0 0.0
  %1077 = vmatprep.subr.mxu0 0.0
  %1078 = vmatpush1.msra.mxu0 0.0
  %1079 = vmatprep.subr.mxu0 0.0
  %1080 = vmatpush1.msra.mxu0 0.0
  %1081 = vmatprep.subr.mxu0 0.0
  %1082 = vmatpush1.msra.mxu0 0.0
  %1083 = vmatprep.subr.mxu0 0.0
  %1084 = vmatpush1.msra.mxu0 0.0
  %1085 = vmatprep.subr.mxu0 0.0
  %1086 = vmatpush1.msra.mxu0 0.0
  %1087 = vmatprep.subr.mxu0 0.0
  %1088 = vmatpush1.msra.mxu0 0.0
  %1089 = vmatprep.subr.mxu0 0.0
  %1090 = vmatpush1.msra.mxu0 0.0
  %1091 = vmatprep.mubr.f32.mxu0 0.0
  %v1092 = vand.u32 %v94, 4294901760
  %1093 = vmatmul.mubr.f32.gmra.mrb[0].mxu0 %v1092
  %v1094 = vpop.f32.mrb[0].mxu0
  %v1095 = vadd.f32 %v934, %v1094
  %v1096 = vpop.f32.mrb[0].mxu0
  %1097 = vmatprep.mubr.f32.mxu0 0.0
  %v1098 = vand.u32 %v95, 4294901760
  %1099 = vmatmul.mubr.f32.gmra.mrb[0].mxu0 %v1098
  %v1100 = vpop.f32.mrb[0].mxu0
  %v1101 = vadd.f32 %v940, %v1100
  %v1102 = vpop.f32.mrb[0].mxu0
  %1103 = vmatprep.mubr.f32.mxu0 0.0
  %v1104 = vand.u32 %v96, 4294901760
  %1105 = vmatmul.mubr.f32.gmra.mrb[0].mxu0 %v1104
  %v1106 = vpop.f32.mrb[0].mxu0
  %v1107 = vadd.f32 %v946, %v1106
  %v1108 = vpop.f32.mrb[0].mxu0
  %1109 = vmatprep.mubr.f32.mxu0 0.0
  %v1110 = vand.u32 %v97, 4294901760
  %1111 = vmatmul.mubr.f32.gmra.mrb[0].mxu0 %v1110
  %v1112 = vpop.f32.mrb[0].mxu0
  %v1113 = vadd.f32 %v952, %v1112
  %v1114 = vpop.f32.mrb[0].mxu0
  %1115 = vmatprep.mubr.f32.mxu0 0.0
  %v1116 = vand.u32 %v98, 4294901760
  %1117 = vmatmul.mubr.f32.gmra.mrb[0].mxu0 %v1116
  %v1118 = vpop.f32.mrb[0].mxu0
  %v1119 = vadd.f32 %v958, %v1118
  %v1120 = vpop.f32.mrb[0].mxu0
  %1121 = vmatprep.mubr.f32.mxu0 0.0
  %v1122 = vand.u32 %v99, 4294901760
  %1123 = vmatmul.mubr.f32.gmra.mrb[0].mxu0 %v1122
  %v1124 = vpop.f32.mrb[0].mxu0
  %v1125 = vadd.f32 %v964, %v1124
  %v1126 = vpop.f32.mrb[0].mxu0
  %1127 = vmatprep.mubr.f32.mxu0 0.0
  %v1128 = vand.u32 %v100, 4294901760
  %1129 = vmatmul.mubr.f32.gmra.mrb[0].mxu0 %v1128
  %v1130 = vpop.f32.mrb[0].mxu0
  %v1131 = vadd.f32 %v970, %v1130
  %v1132 = vpop.f32.mrb[0].mxu0
  %1133 = vmatprep.mubr.f32.mxu0 0.0
  %v1134 = vand.u32 %v101, 4294901760
  %1135 = vmatmul.mubr.f32.gmra.mrb[0].mxu0 %v1134
  %v1136 = vpop.f32.mrb[0].mxu0
  %v1137 = vadd.f32 %v976, %v1136
  %v1138 = vpop.f32.mrb[0].mxu0
  %1139 = vmatprep.mubr.f32.mxu0 0.0
  %v1140 = vand.u32 %v102, 4294901760
  %1141 = vmatmul.mubr.f32.gmra.mrb[0].mxu0 %v1140
  %v1142 = vpop.f32.mrb[0].mxu0
  %v1143 = vadd.f32 %v982, %v1142
  %v1144 = vpop.f32.mrb[0].mxu0
  %1145 = vmatprep.mubr.f32.mxu0 0.0
  %v1146 = vand.u32 %v103, 4294901760
  %1147 = vmatmul.mubr.f32.gmra.mrb[0].mxu0 %v1146
  %v1148 = vpop.f32.mrb[0].mxu0
  %v1149 = vadd.f32 %v988, %v1148
  %v1150 = vpop.f32.mrb[0].mxu0
  %1151 = vmatprep.mubr.f32.mxu0 0.0
  %v1152 = vand.u32 %v104, 4294901760
  %1153 = vmatmul.mubr.f32.gmra.mrb[0].mxu0 %v1152
  %v1154 = vpop.f32.mrb[0].mxu0
  %v1155 = vadd.f32 %v994, %v1154
  %v1156 = vpop.f32.mrb[0].mxu0
  %1157 = vmatprep.mubr.f32.mxu0 0.0
  %v1158 = vand.u32 %v105, 4294901760
  %1159 = vmatmul.mubr.f32.gmra.mrb[0].mxu0 %v1158
  %v1160 = vpop.f32.mrb[0].mxu0
  %v1161 = vadd.f32 %v1000, %v1160
  %v1162 = vpop.f32.mrb[0].mxu0
  %1163 = vmatprep.mubr.f32.mxu0 0.0
  %v1164 = vand.u32 %v106, 4294901760
  %1165 = vmatmul.mubr.f32.gmra.mrb[0].mxu0 %v1164
  %v1166 = vpop.f32.mrb[0].mxu0
  %v1167 = vadd.f32 %v1006, %v1166
  %v1168 = vpop.f32.mrb[0].mxu0
  %1169 = vmatprep.mubr.f32.mxu0 0.0
  %v1170 = vand.u32 %v107, 4294901760
  %1171 = vmatmul.mubr.f32.gmra.mrb[0].mxu0 %v1170
  %v1172 = vpop.f32.mrb[0].mxu0
  %v1173 = vadd.f32 %v1012, %v1172
  %v1174 = vpop.f32.mrb[0].mxu0
  %1175 = vmatprep.mubr.f32.mxu0 0.0
  %v1176 = vand.u32 %v108, 4294901760
  %1177 = vmatmul.mubr.f32.gmra.mrb[0].mxu0 %v1176
  %v1178 = vpop.f32.mrb[0].mxu0
  %v1179 = vadd.f32 %v1018, %v1178
  %v1180 = vpop.f32.mrb[0].mxu0
  %1181 = vmatprep.mubr.f32.mxu0 0.0
  %v1182 = vand.u32 %v109, 4294901760
  %1183 = vmatmul.mubr.f32.gmra.mrb[0].mxu0 %v1182
  %v1184 = vpop.f32.mrb[0].mxu0
  %v1185 = vadd.f32 %v1024, %v1184
  %v1186 = vpop.f32.mrb[0].mxu0
  %1187 = vdwg.mxu0
  %v1188 = vmax.f32 %v1095, 0.0
  %v1189 = vmax.f32 %v1101, 0.0
  %v1190 = vmax.f32 %v1107, 0.0
  %v1191 = vmax.f32 %v1113, 0.0
  %v1192 = vmax.f32 %v1119, 0.0
  %v1193 = vmax.f32 %v1125, 0.0
  %v1194 = vmax.f32 %v1131, 0.0
  %v1195 = vmax.f32 %v1137, 0.0
  %v1196 = vmax.f32 %v1143, 0.0
  %v1197 = vmax.f32 %v1149, 0.0
  %v1198 = vmax.f32 %v1155, 0.0
  %v1199 = vmax.f32 %v1161, 0.0
  %v1200 = vmax.f32 %v1167, 0.0
  %v1201 = vmax.f32 %v1173, 0.0
  %v1202 = vmax.f32 %v1179, 0.0
  %v1203 = vmax.f32 %v1185, 0.0
  %v1204 = vrsqrt.pop %v1188
  %v1205 = vmul.f32 %v1188, %v1204
  %vm1206 = vcmp.eq.f32.partialorder %v1188, inf
  %v1207 = vsel %vm1206, %v1188, %v1205
  %vm1208 = vcmp.eq.f32.partialorder %v1188, 0.0
  %v1209 = vand.u32 %v1188, 2147483648
  %v1210 = vsel %vm1208, %v1209, %v1207
  %v1211 = vrsqrt.pop %v1189
  %v1212 = vmul.f32 %v1189, %v1211
  %vm1213 = vcmp.eq.f32.partialorder %v1189, inf
  %v1214 = vsel %vm1213, %v1189, %v1212
  %vm1215 = vcmp.eq.f32.partialorder %v1189, 0.0
  %v1216 = vand.u32 %v1189, 2147483648
  %v1217 = vsel %vm1215, %v1216, %v1214
  %v1218 = vrsqrt.pop %v1190
  %v1219 = vmul.f32 %v1190, %v1218
  %vm1220 = vcmp.eq.f32.partialorder %v1190, inf
  %v1221 = vsel %vm1220, %v1190, %v1219
  %vm1222 = vcmp.eq.f32.partialorder %v1190, 0.0
  %v1223 = vand.u32 %v1190, 2147483648
  %v1224 = vsel %vm1222, %v1223, %v1221
  %v1225 = vrsqrt.pop %v1191
  %v1226 = vmul.f32 %v1191, %v1225
  %vm1227 = vcmp.eq.f32.partialorder %v1191, inf
  %v1228 = vsel %vm1227, %v1191, %v1226
  %vm1229 = vcmp.eq.f32.partialorder %v1191, 0.0
  %v1230 = vand.u32 %v1191, 2147483648
  %v1231 = vsel %vm1229, %v1230, %v1228
  %v1232 = vrsqrt.pop %v1192
  %v1233 = vmul.f32 %v1192, %v1232
  %vm1234 = vcmp.eq.f32.partialorder %v1192, inf
  %v1235 = vsel %vm1234, %v1192, %v1233
  %vm1236 = vcmp.eq.f32.partialorder %v1192, 0.0
  %v1237 = vand.u32 %v1192, 2147483648
  %v1238 = vsel %vm1236, %v1237, %v1235
  %v1239 = vrsqrt.pop %v1193
  %v1240 = vmul.f32 %v1193, %v1239
  %vm1241 = vcmp.eq.f32.partialorder %v1193, inf
  %v1242 = vsel %vm1241, %v1193, %v1240
  %vm1243 = vcmp.eq.f32.partialorder %v1193, 0.0
  %v1244 = vand.u32 %v1193, 2147483648
  %v1245 = vsel %vm1243, %v1244, %v1242
  %v1246 = vrsqrt.pop %v1194
  %v1247 = vmul.f32 %v1194, %v1246
  %vm1248 = vcmp.eq.f32.partialorder %v1194, inf
  %v1249 = vsel %vm1248, %v1194, %v1247
  %vm1250 = vcmp.eq.f32.partialorder %v1194, 0.0
  %v1251 = vand.u32 %v1194, 2147483648
  %v1252 = vsel %vm1250, %v1251, %v1249
  %v1253 = vrsqrt.pop %v1195
  %v1254 = vmul.f32 %v1195, %v1253
  %vm1255 = vcmp.eq.f32.partialorder %v1195, inf
  %v1256 = vsel %vm1255, %v1195, %v1254
  %vm1257 = vcmp.eq.f32.partialorder %v1195, 0.0
  %v1258 = vand.u32 %v1195, 2147483648
  %v1259 = vsel %vm1257, %v1258, %v1256
  %v1260 = vrsqrt.pop %v1196
  %v1261 = vmul.f32 %v1196, %v1260
  %vm1262 = vcmp.eq.f32.partialorder %v1196, inf
  %v1263 = vsel %vm1262, %v1196, %v1261
  %vm1264 = vcmp.eq.f32.partialorder %v1196, 0.0
  %v1265 = vand.u32 %v1196, 2147483648
  %v1266 = vsel %vm1264, %v1265, %v1263
  %v1267 = vrsqrt.pop %v1197
  %v1268 = vmul.f32 %v1197, %v1267
  %vm1269 = vcmp.eq.f32.partialorder %v1197, inf
  %v1270 = vsel %vm1269, %v1197, %v1268
  %vm1271 = vcmp.eq.f32.partialorder %v1197, 0.0
  %v1272 = vand.u32 %v1197, 2147483648
  %v1273 = vsel %vm1271, %v1272, %v1270
  %v1274 = vrsqrt.pop %v1198
  %v1275 = vmul.f32 %v1198, %v1274
  %vm1276 = vcmp.eq.f32.partialorder %v1198, inf
  %v1277 = vsel %vm1276, %v1198, %v1275
  %vm1278 = vcmp.eq.f32.partialorder %v1198, 0.0
  %v1279 = vand.u32 %v1198, 2147483648
  %v1280 = vsel %vm1278, %v1279, %v1277
  %v1281 = vrsqrt.pop %v1199
  %v1282 = vmul.f32 %v1199, %v1281
  %vm1283 = vcmp.eq.f32.partialorder %v1199, inf
  %v1284 = vsel %vm1283, %v1199, %v1282
  %vm1285 = vcmp.eq.f32.partialorder %v1199, 0.0
  %v1286 = vand.u32 %v1199, 2147483648
  %v1287 = vsel %vm1285, %v1286, %v1284
  %v1288 = vrsqrt.pop %v1200
  %v1289 = vmul.f32 %v1200, %v1288
  %vm1290 = vcmp.eq.f32.partialorder %v1200, inf
  %v1291 = vsel %vm1290, %v1200, %v1289
  %vm1292 = vcmp.eq.f32.partialorder %v1200, 0.0
  %v1293 = vand.u32 %v1200, 2147483648
  %v1294 = vsel %vm1292, %v1293, %v1291
  %v1295 = vrsqrt.pop %v1201
  %v1296 = vmul.f32 %v1201, %v1295
  %vm1297 = vcmp.eq.f32.partialorder %v1201, inf
  %v1298 = vsel %vm1297, %v1201, %v1296
  %vm1299 = vcmp.eq.f32.partialorder %v1201, 0.0
  %v1300 = vand.u32 %v1201, 2147483648
  %v1301 = vsel %vm1299, %v1300, %v1298
  %v1302 = vrsqrt.pop %v1202
  %v1303 = vmul.f32 %v1202, %v1302
  %vm1304 = vcmp.eq.f32.partialorder %v1202, inf
  %v1305 = vsel %vm1304, %v1202, %v1303
  %vm1306 = vcmp.eq.f32.partialorder %v1202, 0.0
  %v1307 = vand.u32 %v1202, 2147483648
  %v1308 = vsel %vm1306, %v1307, %v1305
  %v1309 = vrsqrt.pop %v1203
  %v1310 = vmul.f32 %v1203, %v1309
  %vm1311 = vcmp.eq.f32.partialorder %v1203, inf
  %v1312 = vsel %vm1311, %v1203, %v1310
  %vm1313 = vcmp.eq.f32.partialorder %v1203, 0.0
  %v1314 = vand.u32 %v1203, 2147483648
  %v1315 = vsel %vm1313, %v1314, %v1312
  %vm1316 = vcmask 7168
  %1317 = vst.msk [vmem:[%s3] sm:$0xff] %vm1316, %v1210
  %1318 = vst.msk [vmem:[%s3 + $0x8] sm:$0xff] %vm1316, %v1217
  %1319 = vst.msk [vmem:[%s3 + $0x10] sm:$0xff] %vm1316, %v1224
  %1320 = vst.msk [vmem:[%s3 + $0x18] sm:$0xff] %vm1316, %v1231
  %1321 = vst.msk [vmem:[%s3 + $0x20] sm:$0xff] %vm1316, %v1238
  %1322 = vst.msk [vmem:[%s3 + $0x28] sm:$0xff] %vm1316, %v1245
  %1323 = vst.msk [vmem:[%s3 + $0x30] sm:$0xff] %vm1316, %v1252
  %1324 = vst.msk [vmem:[%s3 + $0x38] sm:$0xff] %vm1316, %v1259
  %1325 = vst.msk [vmem:[%s3 + $0x40] sm:$0xff] %vm1316, %v1266
  %1326 = vst.msk [vmem:[%s3 + $0x48] sm:$0xff] %vm1316, %v1273
  %1327 = vst.msk [vmem:[%s3 + $0x50] sm:$0xff] %vm1316, %v1280
  %1328 = vst.msk [vmem:[%s3 + $0x58] sm:$0xff] %vm1316, %v1287
  %1329 = vst.msk [vmem:[%s3 + $0x60] sm:$0xff] %vm1316, %v1294
  %1330 = vst.msk [vmem:[%s3 + $0x68] sm:$0xff] %vm1316, %v1301
  %1331 = vst.msk [vmem:[%s3 + $0x70] sm:$0xff] %vm1316, %v1308
  %1332 = vst.msk [vmem:[%s3 + $0x78] sm:$0xff] %vm1316, %v1315
  // Predicated region
  $region14: #{_transe_scores.1} parent=0 // pred_check
    _
  $region15: #{_transe_scores.1} parent=0 // pred_check_branch
    %1334 = sbr.rel (0) target = $region17
  $region16: #{_transe_scores.1} parent=0 // pred_region
    _
  $region17: #{_transe_scores.1} parent=0 // pred_fallthru
    _
  // Predicated region
  $region18: #{_transe_scores.1} parent=0 // pred_check
    _
  $region19: #{_transe_scores.1} parent=0 // pred_check_branch
    %1336 = sbr.rel (0) target = $region21
  $region20: #{_transe_scores.1} parent=0 // pred_region
    _
  $region21: #{_transe_scores.1} parent=0 // pred_fallthru
    _

</llo_original>
